<compile_context>
chip_gen: v7x
topology: tpu7x:2x2x1
jax: 0.10.0
libtpu: 0.0.40
codegen_flags: <defaults>
</compile_context>

<pallas_src>
import functools

import jax
import jax.numpy as jnp
from jax.experimental import pallas as pl
from jax.experimental.pallas import tpu as pltpu


_VMEM_LIMIT_BYTES = 48 * 1024 * 1024       # < v7x 64 MiB physical VMEM
_FUSED_SLAB_LIMIT_BYTES = 6 * 1024 * 1024  # per-batch (C, HW) slab for fused path
_TARGET_TILE_BYTES = 4 * 1024 * 1024       # two-pass tile target (lane+sublane dense)


# ---------------------------------------------------------------------------
# Fused kernel: squeeze + excitation MLP + scale for one batch element.
# x block: (1, C, HW) resident; weights are tiny resident VMEM blocks.
# ---------------------------------------------------------------------------
def _fused_se_kernel(x_ref, w1t_ref, b1_ref, w2_ref, b2_ref, o_ref, *, inv_hw):
    xb = x_ref[0]                                                       # (C, HW)

    # squeeze: per-channel spatial mean, f32 accumulation, C stays on sublanes
    mean = jnp.sum(xb.astype(jnp.float32), axis=-1, keepdims=True) * inv_hw  # (C, 1)

    # fc1 + ReLU:  h[r] = relu(sum_c w1[r, c] * mean[c] + b1[r])      -> (1, Cr)
    # (broadcast-multiply + sublane reduce: avoids tiny MXU matmuls entirely)
    h = jnp.sum(w1t_ref[...].astype(jnp.float32) * mean, axis=0, keepdims=True)
    h = jnp.maximum(h + b1_ref[...].astype(jnp.float32), 0.0)          # (1, Cr)

    # fc2 + sigmoid:  g[c] = sigmoid(sum_r w2[c, r] * h[r] + b2[c])   -> (C, 1)
    g = jnp.sum(w2_ref[...].astype(jnp.float32) * h, axis=-1, keepdims=True)
    g = jax.nn.sigmoid(g + b2_ref[...].astype(jnp.float32))            # (C, 1)

    # scale: native-dtype broadcast multiply (gate cast to x dtype)
    o_ref[0] = (xb * g.astype(xb.dtype)).astype(o_ref.dtype)


def _fused_path(x_flat, w1, b1, w2, b2):
    B, C, HW = x_flat.shape
    Cr = w1.shape[0]
    w1t = jnp.transpose(w1)          # (C, Cr)
    b1r = b1.reshape(1, Cr)
    w2m = w2                         # (C, Cr)
    b2c = b2.reshape(C, 1)

    kernel = functools.partial(_fused_se_kernel, inv_hw=1.0 / HW)
    return pl.pallas_call(
        kernel,
        out_shape=jax.ShapeDtypeStruct((B, C, HW), x_flat.dtype),
        grid_spec=pltpu.PrefetchScalarGridSpec(
            num_scalar_prefetch=0,
            grid=(B,),
            in_specs=[
                pl.BlockSpec((1, C, HW), lambda b: (b, 0, 0)),   # x slab
                pl.BlockSpec((C, Cr), lambda b: (0, 0)),         # w1^T (resident)
                pl.BlockSpec((1, Cr), lambda b: (0, 0)),         # b1
                pl.BlockSpec((C, Cr), lambda b: (0, 0)),         # w2
                pl.BlockSpec((C, 1), lambda b: (0, 0)),          # b2
            ],
            out_specs=pl.BlockSpec((1, C, HW), lambda b: (b, 0, 0)),
        ),
        compiler_params=pltpu.CompilerParams(
            dimension_semantics=("parallel",),
            vmem_limit_bytes=_VMEM_LIMIT_BYTES,
        ),
    )(x_flat, w1t, b1r, w2m, b2c)


# ---------------------------------------------------------------------------
# Two-pass fallback (large C*HW slabs): x flattened to (B*C, HW).
# ---------------------------------------------------------------------------
def _row_sum_kernel(x_ref, sum_ref):
    # x_ref: (tr, thw) tile; sum_ref: (tr, 1) f32 accumulator, resident across
    # the HW (last, "arbitrary") grid axis.
    @pl.when(pl.program_id(1) == 0)
    def _():
        sum_ref[...] = jnp.zeros_like(sum_ref)

    sum_ref[...] += jnp.sum(x_ref[...].astype(jnp.float32), axis=-1, keepdims=True)


def _row_scale_kernel(gate_ref, x_ref, o_ref):
    # gate_ref: (tr, 1) in x.dtype; x_ref/o_ref: (tr, thw). Native-dtype multiply.
    o_ref[...] = (x_ref[...] * gate_ref[...]).astype(o_ref.dtype)


def _choose_tiles(rows, hw, itemsize, target_bytes=_TARGET_TILE_BYTES):
    """Pick (tr, thw): sublane/lane tile sizes giving ~target_bytes blocks.

    thw is a multiple of 128 that divides HW exactly (so reduction tiles never
    mix padded lanes into real row sums); if HW isn't 128-aligned the lane axis
    goes full-extent (exempt from the (8,128) rule) and the row axis absorbs the
    tiling instead.
    """
    if hw % 128 == 0:
        max_thw = max(128, (target_bytes // (8 * itemsize)) // 128 * 128)
        thw, t = 128, 256
        while t <= min(hw, max_thw):
            if hw % t == 0:
                thw = t
            t += 128
    else:
        thw = hw
    if rows <= 8:
        tr = rows                                     # full extent (exempt)
    else:
        tr = max(8, min(rows, target_bytes // (thw * itemsize)) // 8 * 8)
    return tr, thw


def _two_pass_path(x_flat, w1, b1, w2, b2):
    B, C, HW = x_flat.shape
    rows = B * C
    x2 = x_flat.reshape(rows, HW)
    itemsize = jnp.dtype(x_flat.dtype).itemsize
    tr, thw = _choose_tiles(rows, HW, itemsize)
    grid = (pl.cdiv(rows, tr), pl.cdiv(HW, thw))

    # -- pass 1: per-row spatial sums (reduction axis last / "arbitrary") ------
    sums = pl.pallas_call(
        _row_sum_kernel,
        out_shape=jax.ShapeDtypeStruct((rows, 1), jnp.float32),
        grid_spec=pltpu.PrefetchScalarGridSpec(
            num_scalar_prefetch=0,
            grid=grid,
            in_specs=[pl.BlockSpec((tr, thw), lambda r, h: (r, h))],
            out_specs=pl.BlockSpec((tr, 1), lambda r, h: (r, 0)),
        ),
        compiler_params=pltpu.CompilerParams(
            dimension_semantics=("parallel", "arbitrary"),
            vmem_limit_bytes=_VMEM_LIMIT_BYTES,
        ),
    )(x2)

    # -- excitation MLP: tiny (B, C) matmuls, once for all batches, in XLA -----
    means = sums.reshape(B, C) * (1.0 / HW)
    h = jnp.maximum(means @ jnp.transpose(w1).astype(jnp.float32)
                    + b1.astype(jnp.float32), 0.0)
    g = jax.nn.sigmoid(h @ jnp.transpose(w2).astype(jnp.float32)
                       + b2.astype(jnp.float32))
    gate = g.astype(x_flat.dtype).reshape(rows, 1)

    # -- pass 2: broadcast scale (both grid axes parallel, lane-dense output) --
    out2 = pl.pallas_call(
        _row_scale_kernel,
        out_shape=jax.ShapeDtypeStruct((rows, HW), x_flat.dtype),
        grid_spec=pltpu.PrefetchScalarGridSpec(
            num_scalar_prefetch=0,
            grid=grid,
            in_specs=[
                pl.BlockSpec((tr, 1), lambda r, h: (r, 0)),     # gate column
                pl.BlockSpec((tr, thw), lambda r, h: (r, h)),   # x tile
            ],
            out_specs=pl.BlockSpec((tr, thw), lambda r, h: (r, h)),
        ),
        compiler_params=pltpu.CompilerParams(
            dimension_semantics=("parallel", "parallel"),
            vmem_limit_bytes=_VMEM_LIMIT_BYTES,
        ),
    )(gate, x2)
    return out2.reshape(B, C, HW)


# ---------------------------------------------------------------------------
# Public wrapper.
# ---------------------------------------------------------------------------
def channel_se_layer(x, w1, b1, w2, b2, *, force_two_pass=False):
    """ChannelSELayer forward.

    x : (B, C, H, W)
    w1: (Cr, C), b1: (Cr,)   -- PyTorch nn.Linear layout (out, in)
    w2: (C, Cr), b2: (C,)
    """
    B, C, H, W = x.shape
    HW = H * W
    x_flat = x.reshape(B, C, HW)
    slab_bytes = C * HW * jnp.dtype(x.dtype).itemsize

    if force_two_pass or slab_bytes > _FUSED_SLAB_LIMIT_BYTES:
        out_flat = _two_pass_path(x_flat, w1, b1, w2, b2)
    else:
        out_flat = _fused_path(x_flat, w1, b1, w2, b2)
    return out_flat.reshape(B, C, H, W)


def _reference(x, w1, b1, w2, b2):
    B, C, H, W = x.shape
    squeeze = x.reshape(B, C, -1).mean(axis=2)               # (B, C)
    h = jax.nn.relu(squeeze @ w1.T + b1)                     # (B, Cr)
    g = jax.nn.sigmoid(h @ w2.T + b2)                        # (B, C)
    return x * g[:, :, None, None]


if __name__ == "__main__":
    key = jax.random.PRNGKey(0)
    kx, k1, k2, k3, k4, kx2 = jax.random.split(key, 6)

    B, C, H, W = 2, 16, 16, 16
    reduction_ratio = 8
    Cr = C // reduction_ratio

    x = jax.random.normal(kx, (B, C, H, W), dtype=jnp.float32)
    # Deterministic synthetic parameters (PyTorch Linear layout: (out, in))
    w1 = jax.random.normal(k1, (Cr, C), dtype=jnp.float32) * 0.1
    b1 = jax.random.normal(k2, (Cr,), dtype=jnp.float32) * 0.1
    w2 = jax.random.normal(k3, (C, Cr), dtype=jnp.float32) * 0.1
    b2 = jax.random.normal(k4, (C,), dtype=jnp.float32) * 0.1

    # Test 1: fused single-pass path (slab fits VMEM).
    out = jax.block_until_ready(channel_se_layer(x, w1, b1, w2, b2))
    ref = _reference(x, w1, b1, w2, b2)
    assert out.shape == (B, C, H, W)
    assert jnp.allclose(out, ref, atol=1e-5, rtol=1e-5), "fused path mismatch"

    # Test 2: two-pass fallback path with HW not 128-aligned (12*12 = 144),
    # exercising the row-tiled (B*C, HW) kernels.
    H2 = W2 = 12
    x2 = jax.random.normal(kx2, (B, C, H2, W2), dtype=jnp.float32)
    out2 = jax.block_until_ready(
        channel_se_layer(x2, w1, b1, w2, b2, force_two_pass=True))
    ref2 = _reference(x2, w1, b1, w2, b2)
    assert out2.shape == (B, C, H2, W2)
    assert jnp.allclose(out2, ref2, atol=1e-5, rtol=1e-5), "two-pass mismatch"

    print("KERNEL_OK")
</pallas_src>

<mosaic_0001>
module attributes {stable_mosaic.version = 11 : i64} {
  func.func @_fused_se_kernel(%arg0: i32, %arg1: memref<1x16x256xf32, #tpu.memory_space<vmem>>, %arg2: memref<16x2xf32, #tpu.memory_space<vmem>>, %arg3: memref<1x2xf32, #tpu.memory_space<vmem>>, %arg4: memref<16x2xf32, #tpu.memory_space<vmem>>, %arg5: memref<16x1xf32, #tpu.memory_space<vmem>>, %arg6: memref<1x16x256xf32, #tpu.memory_space<vmem>>) attributes {dimension_semantics = [#tpu.dimension_semantics<parallel>], iteration_bounds = array<i64: 2>, scalar_prefetch = 0 : i64, scratch_operands = 0 : i64, tpu.core_type = #tpu.core_type<tc>, window_params = [{transform_indices = @transform_0, window_bounds = array<i64: 1, 16, 256>}, {pipeline_mode = #tpu.pipeline_mode<synchronous>, transform_indices = @transform_1, window_bounds = array<i64: 16, 2>}, {pipeline_mode = #tpu.pipeline_mode<synchronous>, transform_indices = @transform_2, window_bounds = array<i64: 1, 2>}, {pipeline_mode = #tpu.pipeline_mode<synchronous>, transform_indices = @transform_3, window_bounds = array<i64: 16, 2>}, {pipeline_mode = #tpu.pipeline_mode<synchronous>, transform_indices = @transform_4, window_bounds = array<i64: 16, 1>}, {transform_indices = @transform_5, window_bounds = array<i64: 1, 16, 256>}]} {
    %c0 = arith.constant 0 : index
    %c0_0 = arith.constant 0 : index
    %c0_1 = arith.constant 0 : index
    %0 = vector.load %arg1[%c0, %c0_0, %c0_1] : memref<1x16x256xf32, #tpu.memory_space<vmem>>, vector<1x16x256xf32>
    %1 = vector.shape_cast %0 : vector<1x16x256xf32> to vector<16x256xf32>
    %cst = arith.constant dense<0.000000e+00> : vector<16xf32>
    %2 = vector.multi_reduction <add>, %1, %cst [1] : vector<16x256xf32> to vector<16xf32>
    %3 = vector.shape_cast %2 : vector<16xf32> to vector<16x1xf32>
    %cst_2 = arith.constant 3.906250e-03 : f32
    %4 = vector.broadcast %cst_2 : f32 to vector<16x1xf32>
    %5 = arith.mulf %3, %4 : vector<16x1xf32>
    %c0_3 = arith.constant 0 : index
    %c0_4 = arith.constant 0 : index
    %6 = vector.load %arg2[%c0_3, %c0_4] : memref<16x2xf32, #tpu.memory_space<vmem>>, vector<16x2xf32>
    %7 = vector.broadcast %5 : vector<16x1xf32> to vector<16x2xf32>
    %8 = arith.mulf %6, %7 : vector<16x2xf32>
    %cst_5 = arith.constant dense<0.000000e+00> : vector<2xf32>
    %9 = vector.multi_reduction <add>, %8, %cst_5 [0] : vector<16x2xf32> to vector<2xf32>
    %10 = vector.shape_cast %9 : vector<2xf32> to vector<1x2xf32>
    %c0_6 = arith.constant 0 : index
    %c0_7 = arith.constant 0 : index
    %11 = vector.load %arg3[%c0_6, %c0_7] : memref<1x2xf32, #tpu.memory_space<vmem>>, vector<1x2xf32>
    %12 = arith.addf %10, %11 : vector<1x2xf32>
    %cst_8 = arith.constant 0.000000e+00 : f32
    %13 = vector.broadcast %cst_8 : f32 to vector<1x2xf32>
    %14 = arith.maximumf %12, %13 : vector<1x2xf32>
    %c0_9 = arith.constant 0 : index
    %c0_10 = arith.constant 0 : index
    %15 = vector.load %arg4[%c0_9, %c0_10] : memref<16x2xf32, #tpu.memory_space<vmem>>, vector<16x2xf32>
    %16 = vector.broadcast %14 : vector<1x2xf32> to vector<16x2xf32>
    %17 = arith.mulf %15, %16 : vector<16x2xf32>
    %cst_11 = arith.constant dense<0.000000e+00> : vector<16xf32>
    %18 = vector.multi_reduction <add>, %17, %cst_11 [1] : vector<16x2xf32> to vector<16xf32>
    %19 = vector.shape_cast %18 : vector<16xf32> to vector<16x1xf32>
    %c0_12 = arith.constant 0 : index
    %c0_13 = arith.constant 0 : index
    %20 = vector.load %arg5[%c0_12, %c0_13] : memref<16x1xf32, #tpu.memory_space<vmem>>, vector<16x1xf32>
    %21 = arith.addf %19, %20 : vector<16x1xf32>
    %22 = arith.negf %21 : vector<16x1xf32>
    %23 = math.exp %22 : vector<16x1xf32>
    %cst_14 = arith.constant 1.000000e+00 : f32
    %24 = vector.broadcast %cst_14 : f32 to vector<16x1xf32>
    %25 = arith.addf %24, %23 : vector<16x1xf32>
    %26 = arith.divf %24, %25 : vector<16x1xf32>
    %27 = vector.broadcast %26 : vector<16x1xf32> to vector<16x256xf32>
    %28 = arith.mulf %1, %27 : vector<16x256xf32>
    %c0_15 = arith.constant 0 : index
    %c0_16 = arith.constant 0 : index
    %c0_17 = arith.constant 0 : index
    %29 = vector.load %arg6[%c0_15, %c0_16, %c0_17] : memref<1x16x256xf32, #tpu.memory_space<vmem>>, vector<1x16x256xf32>
    %30 = vector.shape_cast %29 : vector<1x16x256xf32> to vector<16x256xf32>
    %31 = vector.shape_cast %28 : vector<16x256xf32> to vector<1x16x256xf32>
    tpu.vector_store %arg6[%c0_15, %c0_16, %c0_17], %31 {strides = array<i32>} : memref<1x16x256xf32, #tpu.memory_space<vmem>>, vector<1x16x256xf32>,
    return
  }
  func.func @transform_0(%arg0: i32) -> (i32, i32, i32) {
    %c0_i32 = arith.constant 0 : i32
    %c0_i32_0 = arith.constant 0 : i32
    %c0_i32_1 = arith.constant 0 : i32
    return %arg0, %c0_i32, %c0_i32_0 : i32, i32, i32
  }
  func.func @transform_1(%arg0: i32) -> (i32, i32) {
    %c0_i32 = arith.constant 0 : i32
    %c0_i32_0 = arith.constant 0 : i32
    %c0_i32_1 = arith.constant 0 : i32
    return %c0_i32, %c0_i32_0 : i32, i32
  }
  func.func @transform_2(%arg0: i32) -> (i32, i32) {
    %c0_i32 = arith.constant 0 : i32
    %c0_i32_0 = arith.constant 0 : i32
    %c0_i32_1 = arith.constant 0 : i32
    return %c0_i32, %c0_i32_0 : i32, i32
  }
  func.func @transform_3(%arg0: i32) -> (i32, i32) {
    %c0_i32 = arith.constant 0 : i32
    %c0_i32_0 = arith.constant 0 : i32
    %c0_i32_1 = arith.constant 0 : i32
    return %c0_i32, %c0_i32_0 : i32, i32
  }
  func.func @transform_4(%arg0: i32) -> (i32, i32) {
    %c0_i32 = arith.constant 0 : i32
    %c0_i32_0 = arith.constant 0 : i32
    %c0_i32_1 = arith.constant 0 : i32
    return %c0_i32, %c0_i32_0 : i32, i32
  }
  func.func @transform_5(%arg0: i32) -> (i32, i32, i32) {
    %c0_i32 = arith.constant 0 : i32
    %c0_i32_0 = arith.constant 0 : i32
    %c0_i32_1 = arith.constant 0 : i32
    return %arg0, %c0_i32, %c0_i32_0 : i32, i32, i32
  }
}

</mosaic_0001>

<llo_original>
// kernel: tpu_custom_call.1
$region0: #{tpu_custom_call.1}
  #allocation0 [shape = 'u32[]', space=smem, size = 0x4, offset = 0x4, fixed_abs, tag = 'smem constant byte address 0x4 - core index']
  #allocation1 [shape = 'u32[144,128]{1,0:T(1,128)}', space=vmem, size = 0x12000, scoped, tag = 'internal scratch']
  %s0 = inlined_call_operand.hbm [shape: f32[2,16,256], index: 0, kind: input, shape index: {}]
  %s1 = inlined_call_operand.vmem [shape: f32[16,2], index: 1, kind: input, shape index: {}]
  %s2 = inlined_call_operand.vmem [shape: f32[1,2], index: 2, kind: input, shape index: {}]
  %s3 = inlined_call_operand.vmem [shape: f32[16,2], index: 3, kind: input, shape index: {}]
  %s4 = inlined_call_operand.vmem [shape: f32[16,1], index: 4, kind: input, shape index: {}]
  %s5 = inlined_call_operand.hbm [shape: f32[2,16,256], index: 5, kind: output, shape index: {}]
  %s6 = sld [smem:[#allocation0]]
  $region57: #{tpu_custom_call.1} parent=0
    _
  %s8 = ssub.s32 1, %s6
  %s9 = scalar_select 0, %s8, %s6
  $region1: #{tpu_custom_call.1} parent=0
    #allocation2 [shape = 'u8[32768]{0}', space=vmem, size = 0x8000, scoped, tag = 'input window, operand 0']
    #allocation3 [shape = 's32[2]{0}', space=sflag, size = 0x8, scoped, tag = 'scoped memory for tpu_custom_call.1']
    #allocation4 [shape = 's32[2]{0}', space=sflag, size = 0x8, scoped, tag = 'scoped memory for tpu_custom_call.1']
    #allocation5 [shape = 'u8[32768]{0}', space=vmem, size = 0x8000, scoped, tag = 'output window, operand 0']
    %10 = vsyncpa [#allocation3], 0
    %s11 = scalar_lea.sflag [#allocation3], 1
    %12 = vsyncpa %s11, 0
    %13 = vsyncpa [#allocation4], 0
    %s14 = scalar_lea.sflag [#allocation4], 1
    %15 = vsyncpa %s14, 0
    loop: start=0, step=1, limit=4
    $region2: #{tpu_custom_call.1} parent=1 // loop_pre_header
      _
    $region3: #{tpu_custom_call.1} parent=1 // loop_header
      %s17 = sphi 0, %s21
      %p18 = scmp.ge.s32.totalorder %s17, 4
      %s27 = sphi 0, %s29
      %s30 = sphi 0, %s27
      %s31 = sphi 0, %s30
      %s47 = sphi 0, %s31
      %s51 = sphi 0, %s51
      %s53 = sphi 0, %s51
      %s54 = sphi 0, %s53
      %s68 = sphi 0, %s54
      %s72 = sphi 0, %s72
      %s74 = sphi 0, %s72
      %s75 = sphi 0, %s74
      %s89 = sphi 0, %s75
      %s93 = sphi 0, %s93
      %s95 = sphi 0, %s93
      %s96 = sphi 0, %s95
      %s110 = sphi 0, %s96
      %s114 = sphi 0, %s114
      %s116 = sphi 0, %s114
      %s117 = sphi 0, %s116
      %s131 = sphi 0, %s117
      %s137 = sphi 0, %s139
      %s140 = sphi 0, %s137
      %s141 = sphi 0, %s140
      %s157 = sphi 0, %s141
    $region4: #{tpu_custom_call.1} parent=1 // loop_header_branch
      %20 = sbr.rel (%p18) target = $region8
    $region5: #{tpu_custom_call.1} parent=1 // loop_body
      %s22 = ssub.s32 %s17, 1
      %s23 = ssub.s32 %s17, 2
      %s24 = sadd.s32 %s17, 1
      %s25 = ssub.s32 %s17, %s24
      %p26 = scmp.eq.s32.totalorder %s25, 0
      %s28 = sadd.s32 %s27, 1
      %s29 = scalar_select %p26, %s27, %s28
      %p32 = pneg %p26
      %p33 = scmp.eq.s32.totalorder %s17, 1
      %p34 = por %p32, %p33
      %p35 = scmp.ne.s32.totalorder %s27, %s30
      %p36 = scmp.eq.s32.totalorder %s17, 0
      %p37 = por %p35, %p36
      %p38 = scmp.ne.s32.totalorder %s27, %s30
      %p39 = scmp.eq.s32.totalorder %s22, 1
      %p40 = por %p38, %p39
      %p41 = scmp.ne.s32.totalorder %s30, %s31
      %p42 = scmp.eq.s32.totalorder %s22, 0
      %p43 = por %p41, %p42
      %p44 = scmp.ne.s32.totalorder %s30, %s31
      %p45 = scmp.eq.s32.totalorder %s23, 1
      %p46 = por %p44, %p45
      %p48 = scmp.ne.s32.totalorder %s31, %s47
      %p49 = scmp.eq.s32.totalorder %s23, 0
      %p50 = por %p48, %p49
      %s52 = sadd.s32 %s51, 1
      %p55 = scmp.eq.s32.totalorder %s17, 1
      %p56 = scmp.ne.s32.totalorder %s51, %s53
      %p57 = scmp.eq.s32.totalorder %s17, 0
      %p58 = por %p56, %p57
      %p59 = scmp.ne.s32.totalorder %s51, %s53
      %p60 = scmp.eq.s32.totalorder %s22, 1
      %p61 = por %p59, %p60
      %p62 = scmp.ne.s32.totalorder %s53, %s54
      %p63 = scmp.eq.s32.totalorder %s22, 0
      %p64 = por %p62, %p63
      %p65 = scmp.ne.s32.totalorder %s53, %s54
      %p66 = scmp.eq.s32.totalorder %s23, 1
      %p67 = por %p65, %p66
      %p69 = scmp.ne.s32.totalorder %s54, %s68
      %p70 = scmp.eq.s32.totalorder %s23, 0
      %p71 = por %p69, %p70
      %s73 = sadd.s32 %s72, 1
      %p76 = scmp.eq.s32.totalorder %s17, 1
      %p77 = scmp.ne.s32.totalorder %s72, %s74
      %p78 = scmp.eq.s32.totalorder %s17, 0
      %p79 = por %p77, %p78
      %p80 = scmp.ne.s32.totalorder %s72, %s74
      %p81 = scmp.eq.s32.totalorder %s22, 1
      %p82 = por %p80, %p81
      %p83 = scmp.ne.s32.totalorder %s74, %s75
      %p84 = scmp.eq.s32.totalorder %s22, 0
      %p85 = por %p83, %p84
      %p86 = scmp.ne.s32.totalorder %s74, %s75
      %p87 = scmp.eq.s32.totalorder %s23, 1
      %p88 = por %p86, %p87
      %p90 = scmp.ne.s32.totalorder %s75, %s89
      %p91 = scmp.eq.s32.totalorder %s23, 0
      %p92 = por %p90, %p91
      %s94 = sadd.s32 %s93, 1
      %p97 = scmp.eq.s32.totalorder %s17, 1
      %p98 = scmp.ne.s32.totalorder %s93, %s95
      %p99 = scmp.eq.s32.totalorder %s17, 0
      %p100 = por %p98, %p99
      %p101 = scmp.ne.s32.totalorder %s93, %s95
      %p102 = scmp.eq.s32.totalorder %s22, 1
      %p103 = por %p101, %p102
      %p104 = scmp.ne.s32.totalorder %s95, %s96
      %p105 = scmp.eq.s32.totalorder %s22, 0
      %p106 = por %p104, %p105
      %p107 = scmp.ne.s32.totalorder %s95, %s96
      %p108 = scmp.eq.s32.totalorder %s23, 1
      %p109 = por %p107, %p108
      %p111 = scmp.ne.s32.totalorder %s96, %s110
      %p112 = scmp.eq.s32.totalorder %s23, 0
      %p113 = por %p111, %p112
      %s115 = sadd.s32 %s114, 1
      %p118 = scmp.eq.s32.totalorder %s17, 1
      %p119 = scmp.ne.s32.totalorder %s114, %s116
      %p120 = scmp.eq.s32.totalorder %s17, 0
      %p121 = por %p119, %p120
      %p122 = scmp.ne.s32.totalorder %s114, %s116
      %p123 = scmp.eq.s32.totalorder %s22, 1
      %p124 = por %p122, %p123
      %p125 = scmp.ne.s32.totalorder %s116, %s117
      %p126 = scmp.eq.s32.totalorder %s22, 0
      %p127 = por %p125, %p126
      %p128 = scmp.ne.s32.totalorder %s116, %s117
      %p129 = scmp.eq.s32.totalorder %s23, 1
      %p130 = por %p128, %p129
      %p132 = scmp.ne.s32.totalorder %s117, %s131
      %p133 = scmp.eq.s32.totalorder %s23, 0
      %p134 = por %p132, %p133
      %s135 = ssub.s32 %s17, %s24
      %p136 = scmp.eq.s32.totalorder %s135, 0
      %s138 = sadd.s32 %s137, 1
      %s139 = scalar_select %p136, %s137, %s138
      %p142 = pneg %p136
      %p143 = scmp.eq.s32.totalorder %s17, 1
      %p144 = por %p142, %p143
      %p145 = scmp.ne.s32.totalorder %s137, %s140
      %p146 = scmp.eq.s32.totalorder %s17, 0
      %p147 = por %p145, %p146
      %p148 = scmp.ne.s32.totalorder %s137, %s140
      %p149 = scmp.eq.s32.totalorder %s22, 1
      %p150 = por %p148, %p149
      %p151 = scmp.ne.s32.totalorder %s140, %s141
      %p152 = scmp.eq.s32.totalorder %s22, 0
      %p153 = por %p151, %p152
      %p154 = scmp.ne.s32.totalorder %s140, %s141
      %p155 = scmp.eq.s32.totalorder %s23, 1
      %p156 = por %p154, %p155
      %p158 = scmp.ne.s32.totalorder %s141, %s157
      %p159 = scmp.eq.s32.totalorder %s23, 0
      %p160 = por %p158, %p159
      %p161 = scmp.le.s32.totalorder 1, %s17
      %p162 = scmp.lt.s32.totalorder %s17, 3
      %p163 = pnand %p161, %p162
      %p164 = pneg %p163
      // Predicated region
      $region9: #{tpu_custom_call.1} parent=5 // pred_check
        _
      $region10: #{tpu_custom_call.1} parent=5 // pred_check_branch
        %166 = sbr.rel (%p163) target = $region12
      $region11: #{tpu_custom_call.1} parent=5 // pred_region
        %s167 = ssub.s32 %s17, 1
        // Predicated region
        $region13: #{tpu_custom_call.1} parent=11 // pred_check
          %p168 = pneg %p64
        $region14: #{tpu_custom_call.1} parent=11 // pred_check_branch
          %170 = sbr.rel (%p168) target = $region16
        $region15: #{tpu_custom_call.1} parent=11 // pred_region
          _
        $region16: #{tpu_custom_call.1} parent=11 // pred_fallthru
          _
        // Predicated region
        $region17: #{tpu_custom_call.1} parent=11 // pred_check
          %p171 = pneg %p85
        $region18: #{tpu_custom_call.1} parent=11 // pred_check_branch
          %173 = sbr.rel (%p171) target = $region20
        $region19: #{tpu_custom_call.1} parent=11 // pred_region
          _
        $region20: #{tpu_custom_call.1} parent=11 // pred_fallthru
          _
        // Predicated region
        $region21: #{tpu_custom_call.1} parent=11 // pred_check
          %p174 = pneg %p106
        $region22: #{tpu_custom_call.1} parent=11 // pred_check_branch
          %176 = sbr.rel (%p174) target = $region24
        $region23: #{tpu_custom_call.1} parent=11 // pred_region
          _
        $region24: #{tpu_custom_call.1} parent=11 // pred_fallthru
          _
        // Predicated region
        $region25: #{tpu_custom_call.1} parent=11 // pred_check
          %p177 = pneg %p127
        $region26: #{tpu_custom_call.1} parent=11 // pred_check_branch
          %179 = sbr.rel (%p177) target = $region28
        $region27: #{tpu_custom_call.1} parent=11 // pred_region
          _
        $region28: #{tpu_custom_call.1} parent=11 // pred_fallthru
          _
      $region12: #{tpu_custom_call.1} parent=5 // pred_fallthru
        _
      %p180 = scmp.lt.s32.totalorder %s17, 2
      // Predicated region
      $region29: #{tpu_custom_call.1} parent=5 // pred_check
        %p181 = pneg %p180
      $region30: #{tpu_custom_call.1} parent=5 // pred_check_branch
        %183 = sbr.rel (%p181) target = $region32
      $region31: #{tpu_custom_call.1} parent=5 // pred_region
        // Predicated region
        $region33: #{tpu_custom_call.1} parent=31 // pred_check
          %p184 = pneg %p37
        $region34: #{tpu_custom_call.1} parent=31 // pred_check_branch
          %186 = sbr.rel (%p184) target = $region36
        $region35: #{tpu_custom_call.1} parent=31 // pred_region
          %s187 = sand.u32 %s27, 1
          %s188 = scalar_lea.sflag [#allocation3], %s187
          %s189 = sand.u32 %s27, 1
          %s190 = smul.addr %s189, 32
          %s191 = scalar_lea.vmem [#allocation2], %s190
          %s193 = ssub.s32 512, 512
          %194 = vsyncadd %s188, %s193
          %s195 = smul.addr %s17, 4
          %s196 = smul.addr %s195, 128
          %s197 = scalar_lea.hbm %s0, %s196
          %s198 = sshll.u32 %s191, 4
          %s199 = int_to_ptr.vmem [resolvable:$true] %s198
          %204 = dma.hbm_to_vmem [thread:$0]  %s197, 512, %s199, %s188, 256, 256, 16
        $region36: #{tpu_custom_call.1} parent=31 // pred_fallthru
          _
      $region32: #{tpu_custom_call.1} parent=5 // pred_fallthru
        _
      %p205 = scmp.le.s32.totalorder 1, %s17
      %p206 = scmp.lt.s32.totalorder %s17, 3
      %p207 = pnand %p205, %p206
      %p208 = pneg %p207
      // Predicated region
      $region37: #{tpu_custom_call.1} parent=5 // pred_check
        _
      $region38: #{tpu_custom_call.1} parent=5 // pred_check_branch
        %210 = sbr.rel (%p207) target = $region40
      $region39: #{tpu_custom_call.1} parent=5 // pred_region
        %s211 = ssub.s32 %s17, 1
        %s212 = sand.u32 %s30, 1
        %s213 = scalar_lea.sflag [#allocation3], %s212
        %s214 = sand.u32 %s30, 1
        %s215 = smul.addr %s214, 32
        %s216 = scalar_lea.vmem [#allocation2], %s215
        // Predicated region
        $region41: #{tpu_custom_call.1} parent=39 // pred_check
          %p217 = pneg %p43
        $region42: #{tpu_custom_call.1} parent=39 // pred_check_branch
          %219 = sbr.rel (%p217) target = $region44
        $region43: #{tpu_custom_call.1} parent=39 // pred_region
          %220 = dma.done %s213, 512
        $region44: #{tpu_custom_call.1} parent=39 // pred_fallthru
          _
        %s221 = sand.u32 %s30, 1
        %s222 = scalar_lea.sflag [#allocation3], %s221
        %s223 = sand.u32 %s30, 1
        %s224 = smul.addr %s223, 32
        %s225 = scalar_lea.vmem [#allocation2], %s224
        %p226 = pneg %p43
        %p227 = pneg %p40
        %p228 = pneg %p64
        %p229 = pneg %p61
        %p230 = pneg %p85
        %p231 = pneg %p82
        %p232 = pneg %p106
        %p233 = pneg %p103
        %p234 = pneg %p127
        %p235 = pneg %p124
        %p236 = pneg %p153
        %p237 = pneg %p150
        %s238 = sand.u32 %s140, 1
        %s239 = scalar_lea.sflag [#allocation4], %s238
        %s240 = sand.u32 %s140, 1
        %s241 = smul.addr %s240, 32
        %s242 = scalar_lea.vmem [#allocation5], %s241
        %v243 = vld [vmem:[%s216] sm:$0xff]
        %v244 = vld [vmem:[%s216 + $0x8] sm:$0xff]
        %v245 = vld [vmem:[%s216 + $0x10] sm:$0xff]
        %v246 = vld [vmem:[%s216 + $0x18] sm:$0xff]
        %v247 = vadd.f32 %v243, %v244
        %248 = vadd.xlane.f32.xlu0 %v247
        %v249 = vpop.xlane.xlu0 %248
        %v250 = vadd.f32 %v245, %v246
        %251 = vadd.xlane.f32.xlu0 %v250
        %v252 = vpop.xlane.xlu0 %251
        %v253 = vmul.f32 %v249, 0.00390625
        %v254 = vmul.f32 %v252, 0.00390625
        %v255 = vld [vmem:[%s1] sm:$0xff]
        %v256 = vld [vmem:[%s1 + $0x8] sm:$0xff]
        %v257 = vmul.f32 %v255, %v253
        %v258 = vmul.f32 %v256, %v254
        %vm259 = vcmask 15360
        %v260 = vsel %vm259, %v257, 0.0
        %v261 = vsel %vm259, %v258, 0.0
        %v262 = vadd.f32 %v260, %v261
        %v263 = vrot.slane %v262, 4
        %v264 = vadd.f32 %v262, %v263
        %v265 = vrot.slane %v264, 2
        %v266 = vadd.f32 %v264, %v265
        %v267 = vrot.slane %v266, 1
        %v268 = vadd.f32 %v266, %v267
        %v269 = vld [vmem:[%s2] sm:$0x1]
        %v270 = vadd.f32 %v268, %v269
        %v271 = vmax.f32 %v270, 0.0
        %v272 = vld [vmem:[%s3] sm:$0xff]
        %v273 = vld [vmem:[%s3 + $0x8] sm:$0xff]
        %v274 = vlaneseq
        %v275 = vshrl.u32 %v274, 7
        %v276 = vsub.s32 0, %v275
        %v277 = vrot.slane %v271, %v276
        %v278 = vmul.f32 %v272, %v277
        %v279 = vmul.f32 %v273, %v277
        %v280 = vsel %vm259, %v278, 0.0
        %281 = vadd.xlane.f32.xlu0 %v280
        %v282 = vpop.xlane.xlu0 %281
        %v283 = vsel %vm259, %v279, 0.0
        %284 = vadd.xlane.f32.xlu0 %v283
        %v285 = vpop.xlane.xlu0 %284
        %v286 = vld [vmem:[%s4] sm:$0xff]
        %v287 = vld [vmem:[%s4 + $0x8] sm:$0xff]
        %v288 = vadd.f32 %v282, %v286
        %v289 = vadd.f32 %v285, %v287
        %v290 = vxor.u32 %v288, 2147483648
        %v291 = vxor.u32 %v289, 2147483648
        %v292 = vmul.f32 %v290, 1.442695
        %v293 = vpow.pop %v292
        %v294 = vmul.f32 %v291, 1.442695
        %v295 = vpow.pop %v294
        %v296 = vadd.f32 %v293, 1.0
        %v297 = vadd.f32 %v295, 1.0
        %v298 = vrcp.pop %v296
        %v299 = vmul.f32 1.0, %v298
        %v300 = vrcp.pop %v297
        %v301 = vmul.f32 1.0, %v300
        %303 = vset.pattern.permute.xlu0 0
        %304 = vperm.xlu0 %303, %v299
        %v305 = vpop.permute.xlu0 %304
        %308 = vset.pattern.permute.xlu0 0
        %309 = vperm.xlu0 %308, %v301
        %v310 = vpop.permute.xlu0 %309
        %v312 = vmul.f32 %v243, %v305
        %v313 = vmul.f32 %v244, %v305
        %v314 = vmul.f32 %v245, %v310
        %v315 = vmul.f32 %v246, %v310
        %316 = vst [vmem:[%s242] sm:$0xff] %v312
        %317 = vst [vmem:[%s242 + $0x8] sm:$0xff] %v313
        %318 = vst [vmem:[%s242 + $0x10] sm:$0xff] %v314
        %319 = vst [vmem:[%s242 + $0x18] sm:$0xff] %v315
        %s320 = sand.u32 %s140, 1
        %s321 = scalar_lea.sflag [#allocation4], %s320
        %s322 = sand.u32 %s140, 1
        %s323 = smul.addr %s322, 32
        %s324 = scalar_lea.vmem [#allocation5], %s323
        // Predicated region
        $region45: #{tpu_custom_call.1} parent=39 // pred_check
          %p325 = pneg %p150
        $region46: #{tpu_custom_call.1} parent=39 // pred_check_branch
          %327 = sbr.rel (%p325) target = $region48
        $region47: #{tpu_custom_call.1} parent=39 // pred_region
          %s329 = ssub.s32 512, 512
          %330 = vsyncadd %s321, %s329
          %s331 = smul.addr %s22, 4
          %s332 = smul.addr %s331, 128
          %s333 = scalar_lea.hbm %s5, %s332
          %s334 = sshll.u32 %s324, 4
          %s335 = int_to_ptr.vmem [resolvable:$true] %s334
          %340 = dma.vmem_to_hbm [thread:$0]  %s335, 512, %s333, %s321, 256, 256, 16
        $region48: #{tpu_custom_call.1} parent=39 // pred_fallthru
          _
      $region40: #{tpu_custom_call.1} parent=5 // pred_fallthru
        _
      %p341 = scmp.le.s32.totalorder 2, %s17
      // Predicated region
      $region49: #{tpu_custom_call.1} parent=5 // pred_check
        %p342 = pneg %p341
      $region50: #{tpu_custom_call.1} parent=5 // pred_check_branch
        %344 = sbr.rel (%p342) target = $region52
      $region51: #{tpu_custom_call.1} parent=5 // pred_region
        %s345 = ssub.s32 %s17, 2
        // Predicated region
        $region53: #{tpu_custom_call.1} parent=51 // pred_check
          %p346 = pneg %p156
        $region54: #{tpu_custom_call.1} parent=51 // pred_check_branch
          %348 = sbr.rel (%p346) target = $region56
        $region55: #{tpu_custom_call.1} parent=51 // pred_region
          %s349 = sand.u32 %s141, 1
          %s350 = scalar_lea.sflag [#allocation4], %s349
          %s351 = sand.u32 %s141, 1
          %s352 = smul.addr %s351, 32
          %s353 = scalar_lea.vmem [#allocation5], %s352
          %354 = dma.done %s350, 512
        $region56: #{tpu_custom_call.1} parent=51 // pred_fallthru
          _
      $region52: #{tpu_custom_call.1} parent=5 // pred_fallthru
        _
    $region6: #{tpu_custom_call.1} parent=1 // loop_footer
      %s21 = sadd.s32 1, %s17
    $region7: #{tpu_custom_call.1} parent=1 // loop_footer_branch
      %16 = sbr.rel target = $region3
    $region8: #{tpu_custom_call.1} parent=1 // loop_exit
      _
    %355 = vsyncpa [#allocation3], 1
    %s356 = scalar_lea.sflag [#allocation3], 1
    %357 = vsyncpa %s356, 1
    %358 = vsyncpa [#allocation4], 1
    %s359 = scalar_lea.sflag [#allocation4], 1
    %360 = vsyncpa %s359, 1

</llo_original>
